<compile_context>
chip_gen: v7x
topology: tpu7x:2x2x1
jax: 0.10.0
libtpu: 0.0.40
codegen_flags: <defaults>
</compile_context>

<pallas_src>
import jax
import jax.numpy as jnp
from jax.experimental import pallas as pl
from jax.experimental.pallas import tpu as pltpu

EPS = 1e-5  # torch.nn.LayerNorm default eps


def _layernorm(h, gamma, beta):
    mu = jnp.mean(h, axis=-1, keepdims=True)
    d = h - mu
    var = jnp.mean(d * d, axis=-1, keepdims=True)
    return d * jax.lax.rsqrt(var + EPS) * gamma + beta


def mlp_kernel(x_ref,
               w1_ref, b1_ref, g1_ref, be1_ref,
               w2_ref, b2_ref, g2_ref, be2_ref,
               wc_ref, bc_ref,
               out_ref):
    # bf16 cast of the x tile happens in-kernel (VPU work hidden under MXU/DMA
    # slack) instead of as a separate wrapper-side XLA pass over all of x.
    xb = x_ref[...].astype(jnp.bfloat16)

    # ---- layer 1: Linear -> ReLU -> LayerNorm (dropout = identity in eval) ----
    h1 = jnp.dot(xb, w1_ref[...], preferred_element_type=jnp.float32) + b1_ref[...]
    h1 = jnp.maximum(h1, 0.0)
    h1 = _layernorm(h1, g1_ref[...], be1_ref[...])

    # ---- layer 2: Linear -> (+skip) -> ReLU -> LayerNorm (dropout = identity) ----
    h2 = jnp.dot(h1.astype(jnp.bfloat16), w2_ref[...],
                 preferred_element_type=jnp.float32) + b2_ref[...]
    h2 = jnp.maximum(h2 + h1, 0.0)
    h2 = _layernorm(h2, g2_ref[...], be2_ref[...])

    # ---- classifier head + softmax over classes (dim=1) ----
    logits = jnp.dot(h2.astype(jnp.bfloat16), wc_ref[...],
                     preferred_element_type=jnp.float32) + bc_ref[...]
    m = jnp.max(logits, axis=-1, keepdims=True)
    e = jnp.exp(logits - m)
    inv = pl.reciprocal(jnp.sum(e, axis=-1, keepdims=True), approx=True)
    out_ref[...] = (e * inv).astype(out_ref.dtype)


def _choose_tb(batch, block_b):
    """Largest multiple-of-8 divisor of `batch` that is <= block_b and (when the
    batch is big enough) yields >= 2 grid steps so the v7x megacore can shard
    the batch axis.  Returns None if no clean divisor exists."""
    limit = min(block_b, batch // 2) if batch >= 16 else batch
    limit -= limit % 8
    tb = limit
    while tb >= 8:
        if batch % tb == 0:
            return tb
        tb -= 8
    return None


def two_layer_nn_bells_and_whistles(x, params, *, block_b=8192,
                                    out_dtype=jnp.float32):
    """x: [B, F] float32.  params: dict of weights (see init_params).

    Tiles the batch dimension; TB is a divisor of B (multiple of 8) so no
    pad / slice HBM passes are needed in the common case.  Even TB=8192 rows is
    well under a MiB of activations in VMEM.
    """
    B, F = x.shape
    H = params["w1"].shape[1]
    C = params["wc"].shape[1]

    TB = _choose_tb(B, block_b)
    pad = 0
    if TB is None:
        if B <= block_b:
            TB = B                       # single full-batch tile, no padding
        else:
            TB = block_b - block_b % 8   # rare fallback: ragged huge batch
            pad = (-B) % TB

    xp = jnp.pad(x, ((0, pad), (0, 0))) if pad else x
    Bp = B + pad
    n_blocks = Bp // TB

    # bf16 matmul weight operands (tiny; cast once in the wrapper).
    w1 = params["w1"].astype(jnp.bfloat16)
    w2 = params["w2"].astype(jnp.bfloat16)
    wc = params["wc"].astype(jnp.bfloat16)

    tiled = lambda shape: pl.BlockSpec(shape, lambda i: (i, 0))   # batch-tiled
    fixed = lambda shape: pl.BlockSpec(shape, lambda i: (0, 0))   # VMEM-resident

    out_bytes = jnp.dtype(out_dtype).itemsize
    cost = pl.CostEstimate(
        flops=2 * Bp * (F * H + H * H + H * C),
        transcendentals=Bp * (C + 2),            # exp per logit + 2 rsqrt per row
        bytes_accessed=Bp * (F * 4 + C * out_bytes)
                       + 2 * (F * H + H * H + H * C) + 4 * (5 * H + C),
    )

    out = pl.pallas_call(
        mlp_kernel,
        out_shape=jax.ShapeDtypeStruct((Bp, C), out_dtype),
        grid=(n_blocks,),
        in_specs=[
            tiled((TB, F)),
            fixed((F, H)), fixed((1, H)), fixed((1, H)), fixed((1, H)),
            fixed((H, H)), fixed((1, H)), fixed((1, H)), fixed((1, H)),
            fixed((H, C)), fixed((1, C)),
        ],
        out_specs=tiled((TB, C)),
        compiler_params=pltpu.CompilerParams(
            dimension_semantics=("parallel",)),   # megacore-shard batch on v7x
        cost_estimate=cost,
    )(
        xp,
        w1, params["b1"], params["g1"], params["be1"],
        w2, params["b2"], params["g2"], params["be2"],
        wc, params["bc"],
    )
    return out[:B] if pad else out


def init_params(key, num_input_feats=8, hidden_dim=32, num_classes=10):
    """Deterministic init mimicking torch.nn.Linear default (uniform +/- 1/sqrt(fan_in)).
    Weights are stored transposed: [in_features, out_features]."""
    k1, k2, k3, k4, k5, k6 = jax.random.split(key, 6)

    def lin(kw, kb, fan_in, fan_out):
        bound = 1.0 / jnp.sqrt(fan_in)
        w = jax.random.uniform(kw, (fan_in, fan_out), jnp.float32, -bound, bound)
        b = jax.random.uniform(kb, (1, fan_out), jnp.float32, -bound, bound)
        return w, b

    w1, b1 = lin(k1, k2, num_input_feats, hidden_dim)
    w2, b2 = lin(k3, k4, hidden_dim, hidden_dim)
    wc, bc = lin(k5, k6, hidden_dim, num_classes)
    return {
        "w1": w1, "b1": b1,
        "g1": jnp.ones((1, hidden_dim), jnp.float32),
        "be1": jnp.zeros((1, hidden_dim), jnp.float32),
        "w2": w2, "b2": b2,
        "g2": jnp.ones((1, hidden_dim), jnp.float32),
        "be2": jnp.zeros((1, hidden_dim), jnp.float32),
        "wc": wc, "bc": bc,
    }


def reference_forward(x, p):
    """Pure-JAX f32 reference (for sanity checking)."""
    h1 = jnp.maximum(x @ p["w1"] + p["b1"], 0.0)
    mu = h1.mean(-1, keepdims=True)
    var = ((h1 - mu) ** 2).mean(-1, keepdims=True)
    h1 = (h1 - mu) / jnp.sqrt(var + EPS) * p["g1"] + p["be1"]
    h2 = h1 @ p["w2"] + p["b2"]
    h2 = jnp.maximum(h2 + h1, 0.0)
    mu = h2.mean(-1, keepdims=True)
    var = ((h2 - mu) ** 2).mean(-1, keepdims=True)
    h2 = (h2 - mu) / jnp.sqrt(var + EPS) * p["g2"] + p["be2"]
    logits = h2 @ p["wc"] + p["bc"]
    return jax.nn.softmax(logits, axis=1)


if __name__ == "__main__":
    key = jax.random.PRNGKey(0)
    kx, kp, kx2 = jax.random.split(key, 3)

    F, H, C = 8, 32, 10
    params = init_params(kp, num_input_feats=F, hidden_dim=H, num_classes=C)

    # Small batch (matches the module's documented shape): single tile, TB == B.
    x_small = jax.random.normal(kx, (8, F), jnp.float32)
    p_small = jax.block_until_ready(two_layer_nn_bells_and_whistles(x_small, params))
    r_small = reference_forward(x_small, params)
    assert p_small.shape == (8, C)
    assert jnp.allclose(jnp.sum(p_small, axis=1), 1.0, atol=5e-3)   # approx reciprocal
    assert jnp.allclose(p_small, r_small, atol=2e-2), "mismatch vs f32 reference (small)"

    # Larger batch: exercises the 1-D grid over B (TB=256 -> 2 parallel tiles).
    x_big = jax.random.normal(kx2, (512, F), jnp.float32)
    p_big = jax.block_until_ready(two_layer_nn_bells_and_whistles(x_big, params))
    r_big = reference_forward(x_big, params)
    assert p_big.shape == (512, C)
    assert jnp.allclose(jnp.sum(p_big, axis=1), 1.0, atol=5e-3)
    assert jnp.allclose(p_big, r_big, atol=2e-2), "mismatch vs f32 reference (big)"

    # bf16-output fast path (halves the dominant output HBM stream).
    p_bf16 = jax.block_until_ready(
        two_layer_nn_bells_and_whistles(x_big, params, out_dtype=jnp.bfloat16))
    assert p_bf16.dtype == jnp.bfloat16
    assert jnp.allclose(p_bf16.astype(jnp.float32), r_big, atol=3e-2)

    print("KERNEL_OK")
</pallas_src>

<mosaic_0001>
module attributes {stable_mosaic.version = 11 : i64} {
  func.func @mlp_kernel(%arg0: i32, %arg1: memref<8x8xf32, #tpu.memory_space<vmem>>, %arg2: memref<8x32xbf16, #tpu.memory_space<vmem>>, %arg3: memref<1x32xf32, #tpu.memory_space<vmem>>, %arg4: memref<1x32xf32, #tpu.memory_space<vmem>>, %arg5: memref<1x32xf32, #tpu.memory_space<vmem>>, %arg6: memref<32x32xbf16, #tpu.memory_space<vmem>>, %arg7: memref<1x32xf32, #tpu.memory_space<vmem>>, %arg8: memref<1x32xf32, #tpu.memory_space<vmem>>, %arg9: memref<1x32xf32, #tpu.memory_space<vmem>>, %arg10: memref<32x10xbf16, #tpu.memory_space<vmem>>, %arg11: memref<1x10xf32, #tpu.memory_space<vmem>>, %arg12: memref<8x10xf32, #tpu.memory_space<vmem>>) attributes {dimension_semantics = [#tpu.dimension_semantics<parallel>], iteration_bounds = array<i64: 1>, scalar_prefetch = 0 : i64, scratch_operands = 0 : i64, tpu.core_type = #tpu.core_type<tc>, window_params = [{transform_indices = @transform_0, window_bounds = array<i64: 8, 8>}, {pipeline_mode = #tpu.pipeline_mode<synchronous>, transform_indices = @transform_1, window_bounds = array<i64: 8, 32>}, {pipeline_mode = #tpu.pipeline_mode<synchronous>, transform_indices = @transform_2, window_bounds = array<i64: 1, 32>}, {pipeline_mode = #tpu.pipeline_mode<synchronous>, transform_indices = @transform_3, window_bounds = array<i64: 1, 32>}, {pipeline_mode = #tpu.pipeline_mode<synchronous>, transform_indices = @transform_4, window_bounds = array<i64: 1, 32>}, {pipeline_mode = #tpu.pipeline_mode<synchronous>, transform_indices = @transform_5, window_bounds = array<i64: 32, 32>}, {pipeline_mode = #tpu.pipeline_mode<synchronous>, transform_indices = @transform_6, window_bounds = array<i64: 1, 32>}, {pipeline_mode = #tpu.pipeline_mode<synchronous>, transform_indices = @transform_7, window_bounds = array<i64: 1, 32>}, {pipeline_mode = #tpu.pipeline_mode<synchronous>, transform_indices = @transform_8, window_bounds = array<i64: 1, 32>}, {pipeline_mode = #tpu.pipeline_mode<synchronous>, transform_indices = @transform_9, window_bounds = array<i64: 32, 10>}, {pipeline_mode = #tpu.pipeline_mode<synchronous>, transform_indices = @transform_10, window_bounds = array<i64: 1, 10>}, {transform_indices = @transform_11, window_bounds = array<i64: 8, 10>}]} {
    %c0 = arith.constant 0 : index
    %c0_0 = arith.constant 0 : index
    %0 = vector.load %arg1[%c0, %c0_0] : memref<8x8xf32, #tpu.memory_space<vmem>>, vector<8x8xf32>
    %1 = arith.truncf %0 : vector<8x8xf32> to vector<8x8xbf16>
    %c0_1 = arith.constant 0 : index
    %c0_2 = arith.constant 0 : index
    %2 = vector.load %arg2[%c0_1, %c0_2] : memref<8x32xbf16, #tpu.memory_space<vmem>>, vector<8x32xbf16>
    %cst = arith.constant dense<0.000000e+00> : vector<8x32xf32>
    %3 = tpu.matmul %1, %2, %cst {dimension_numbers = #tpu.dot_dimension_numbers<[1], [0], [0], [1], [0, 0, 1, 1], [], []>} : vector<8x8xbf16>, vector<8x32xbf16>, vector<8x32xf32> -> vector<8x32xf32>
    %c0_3 = arith.constant 0 : index
    %c0_4 = arith.constant 0 : index
    %4 = vector.load %arg3[%c0_3, %c0_4] : memref<1x32xf32, #tpu.memory_space<vmem>>, vector<1x32xf32>
    %5 = vector.broadcast %4 : vector<1x32xf32> to vector<8x32xf32>
    %6 = arith.addf %3, %5 : vector<8x32xf32>
    %cst_5 = arith.constant 0.000000e+00 : f32
    %7 = vector.broadcast %cst_5 : f32 to vector<8x32xf32>
    %8 = arith.maximumf %6, %7 : vector<8x32xf32>
    %c0_6 = arith.constant 0 : index
    %c0_7 = arith.constant 0 : index
    %9 = vector.load %arg4[%c0_6, %c0_7] : memref<1x32xf32, #tpu.memory_space<vmem>>, vector<1x32xf32>
    %c0_8 = arith.constant 0 : index
    %c0_9 = arith.constant 0 : index
    %10 = vector.load %arg5[%c0_8, %c0_9] : memref<1x32xf32, #tpu.memory_space<vmem>>, vector<1x32xf32>
    %cst_10 = arith.constant dense<0.000000e+00> : vector<8xf32>
    %11 = vector.multi_reduction <add>, %8, %cst_10 [1] : vector<8x32xf32> to vector<8xf32>
    %12 = vector.shape_cast %11 : vector<8xf32> to vector<8x1xf32>
    %cst_11 = arith.constant 3.200000e+01 : f32
    %13 = vector.broadcast %cst_11 : f32 to vector<8x1xf32>
    %14 = arith.divf %12, %13 : vector<8x1xf32>
    %15 = vector.broadcast %14 : vector<8x1xf32> to vector<8x32xf32>
    %16 = arith.subf %8, %15 : vector<8x32xf32>
    %17 = arith.mulf %16, %16 : vector<8x32xf32>
    %cst_12 = arith.constant dense<0.000000e+00> : vector<8xf32>
    %18 = vector.multi_reduction <add>, %17, %cst_12 [1] : vector<8x32xf32> to vector<8xf32>
    %19 = vector.shape_cast %18 : vector<8xf32> to vector<8x1xf32>
    %cst_13 = arith.constant 3.200000e+01 : f32
    %20 = vector.broadcast %cst_13 : f32 to vector<8x1xf32>
    %21 = arith.divf %19, %20 : vector<8x1xf32>
    %cst_14 = arith.constant 9.99999974E-6 : f32
    %22 = vector.broadcast %cst_14 : f32 to vector<8x1xf32>
    %23 = arith.addf %21, %22 : vector<8x1xf32>
    %24 = math.rsqrt %23 : vector<8x1xf32>
    %25 = vector.broadcast %24 : vector<8x1xf32> to vector<8x32xf32>
    %26 = arith.mulf %16, %25 : vector<8x32xf32>
    %27 = vector.broadcast %9 : vector<1x32xf32> to vector<8x32xf32>
    %28 = arith.mulf %26, %27 : vector<8x32xf32>
    %29 = vector.broadcast %10 : vector<1x32xf32> to vector<8x32xf32>
    %30 = arith.addf %28, %29 : vector<8x32xf32>
    %31 = arith.truncf %30 : vector<8x32xf32> to vector<8x32xbf16>
    %c0_15 = arith.constant 0 : index
    %c0_16 = arith.constant 0 : index
    %32 = vector.load %arg6[%c0_15, %c0_16] : memref<32x32xbf16, #tpu.memory_space<vmem>>, vector<32x32xbf16>
    %cst_17 = arith.constant dense<0.000000e+00> : vector<8x32xf32>
    %33 = tpu.matmul %31, %32, %cst_17 {dimension_numbers = #tpu.dot_dimension_numbers<[1], [0], [0], [1], [0, 0, 1, 1], [], []>} : vector<8x32xbf16>, vector<32x32xbf16>, vector<8x32xf32> -> vector<8x32xf32>
    %c0_18 = arith.constant 0 : index
    %c0_19 = arith.constant 0 : index
    %34 = vector.load %arg7[%c0_18, %c0_19] : memref<1x32xf32, #tpu.memory_space<vmem>>, vector<1x32xf32>
    %35 = vector.broadcast %34 : vector<1x32xf32> to vector<8x32xf32>
    %36 = arith.addf %33, %35 : vector<8x32xf32>
    %37 = arith.addf %36, %30 : vector<8x32xf32>
    %cst_20 = arith.constant 0.000000e+00 : f32
    %38 = vector.broadcast %cst_20 : f32 to vector<8x32xf32>
    %39 = arith.maximumf %37, %38 : vector<8x32xf32>
    %c0_21 = arith.constant 0 : index
    %c0_22 = arith.constant 0 : index
    %40 = vector.load %arg8[%c0_21, %c0_22] : memref<1x32xf32, #tpu.memory_space<vmem>>, vector<1x32xf32>
    %c0_23 = arith.constant 0 : index
    %c0_24 = arith.constant 0 : index
    %41 = vector.load %arg9[%c0_23, %c0_24] : memref<1x32xf32, #tpu.memory_space<vmem>>, vector<1x32xf32>
    %cst_25 = arith.constant dense<0.000000e+00> : vector<8xf32>
    %42 = vector.multi_reduction <add>, %39, %cst_25 [1] : vector<8x32xf32> to vector<8xf32>
    %43 = vector.shape_cast %42 : vector<8xf32> to vector<8x1xf32>
    %cst_26 = arith.constant 3.200000e+01 : f32
    %44 = vector.broadcast %cst_26 : f32 to vector<8x1xf32>
    %45 = arith.divf %43, %44 : vector<8x1xf32>
    %46 = vector.broadcast %45 : vector<8x1xf32> to vector<8x32xf32>
    %47 = arith.subf %39, %46 : vector<8x32xf32>
    %48 = arith.mulf %47, %47 : vector<8x32xf32>
    %cst_27 = arith.constant dense<0.000000e+00> : vector<8xf32>
    %49 = vector.multi_reduction <add>, %48, %cst_27 [1] : vector<8x32xf32> to vector<8xf32>
    %50 = vector.shape_cast %49 : vector<8xf32> to vector<8x1xf32>
    %cst_28 = arith.constant 3.200000e+01 : f32
    %51 = vector.broadcast %cst_28 : f32 to vector<8x1xf32>
    %52 = arith.divf %50, %51 : vector<8x1xf32>
    %cst_29 = arith.constant 9.99999974E-6 : f32
    %53 = vector.broadcast %cst_29 : f32 to vector<8x1xf32>
    %54 = arith.addf %52, %53 : vector<8x1xf32>
    %55 = math.rsqrt %54 : vector<8x1xf32>
    %56 = vector.broadcast %55 : vector<8x1xf32> to vector<8x32xf32>
    %57 = arith.mulf %47, %56 : vector<8x32xf32>
    %58 = vector.broadcast %40 : vector<1x32xf32> to vector<8x32xf32>
    %59 = arith.mulf %57, %58 : vector<8x32xf32>
    %60 = vector.broadcast %41 : vector<1x32xf32> to vector<8x32xf32>
    %61 = arith.addf %59, %60 : vector<8x32xf32>
    %62 = arith.truncf %61 : vector<8x32xf32> to vector<8x32xbf16>
    %c0_30 = arith.constant 0 : index
    %c0_31 = arith.constant 0 : index
    %63 = vector.load %arg10[%c0_30, %c0_31] : memref<32x10xbf16, #tpu.memory_space<vmem>>, vector<32x10xbf16>
    %cst_32 = arith.constant dense<0.000000e+00> : vector<8x10xf32>
    %64 = tpu.matmul %62, %63, %cst_32 {dimension_numbers = #tpu.dot_dimension_numbers<[1], [0], [0], [1], [0, 0, 1, 1], [], []>} : vector<8x32xbf16>, vector<32x10xbf16>, vector<8x10xf32> -> vector<8x10xf32>
    %c0_33 = arith.constant 0 : index
    %c0_34 = arith.constant 0 : index
    %65 = vector.load %arg11[%c0_33, %c0_34] : memref<1x10xf32, #tpu.memory_space<vmem>>, vector<1x10xf32>
    %66 = vector.broadcast %65 : vector<1x10xf32> to vector<8x10xf32>
    %67 = arith.addf %64, %66 : vector<8x10xf32>
    %cst_35 = arith.constant dense<0xFF800000> : vector<8xf32>
    %68 = vector.multi_reduction <maximumf>, %67, %cst_35 [1] : vector<8x10xf32> to vector<8xf32>
    %69 = vector.shape_cast %68 : vector<8xf32> to vector<8x1xf32>
    %70 = vector.broadcast %69 : vector<8x1xf32> to vector<8x10xf32>
    %71 = arith.subf %67, %70 : vector<8x10xf32>
    %72 = math.exp %71 : vector<8x10xf32>
    %cst_36 = arith.constant dense<0.000000e+00> : vector<8xf32>
    %73 = vector.multi_reduction <add>, %72, %cst_36 [1] : vector<8x10xf32> to vector<8xf32>
    %74 = vector.shape_cast %73 : vector<8xf32> to vector<8x1xf32>
    %75 = tpu.reciprocal %74 {approx = true} : vector<8x1xf32> -> vector<8x1xf32>
    %76 = vector.broadcast %75 : vector<8x1xf32> to vector<8x10xf32>
    %77 = arith.mulf %72, %76 : vector<8x10xf32>
    %c0_37 = arith.constant 0 : index
    %c0_38 = arith.constant 0 : index
    %78 = vector.load %arg12[%c0_37, %c0_38] : memref<8x10xf32, #tpu.memory_space<vmem>>, vector<8x10xf32>
    tpu.vector_store %arg12[%c0_37, %c0_38], %77 {strides = array<i32>} : memref<8x10xf32, #tpu.memory_space<vmem>>, vector<8x10xf32>,
    return
  }
  func.func @transform_0(%arg0: i32) -> (i32, i32) {
    %c0_i32 = arith.constant 0 : i32
    %c0_i32_0 = arith.constant 0 : i32
    return %arg0, %c0_i32 : i32, i32
  }
  func.func @transform_1(%arg0: i32) -> (i32, i32) {
    %c0_i32 = arith.constant 0 : i32
    %c0_i32_0 = arith.constant 0 : i32
    %c0_i32_1 = arith.constant 0 : i32
    return %c0_i32, %c0_i32_0 : i32, i32
  }
  func.func @transform_2(%arg0: i32) -> (i32, i32) {
    %c0_i32 = arith.constant 0 : i32
    %c0_i32_0 = arith.constant 0 : i32
    %c0_i32_1 = arith.constant 0 : i32
    return %c0_i32, %c0_i32_0 : i32, i32
  }
  func.func @transform_3(%arg0: i32) -> (i32, i32) {
    %c0_i32 = arith.constant 0 : i32
    %c0_i32_0 = arith.constant 0 : i32
    %c0_i32_1 = arith.constant 0 : i32
    return %c0_i32, %c0_i32_0 : i32, i32
  }
  func.func @transform_4(%arg0: i32) -> (i32, i32) {
    %c0_i32 = arith.constant 0 : i32
    %c0_i32_0 = arith.constant 0 : i32
    %c0_i32_1 = arith.constant 0 : i32
    return %c0_i32, %c0_i32_0 : i32, i32
  }
  func.func @transform_5(%arg0: i32) -> (i32, i32) {
    %c0_i32 = arith.constant 0 : i32
    %c0_i32_0 = arith.constant 0 : i32
    %c0_i32_1 = arith.constant 0 : i32
    return %c0_i32, %c0_i32_0 : i32, i32
  }
  func.func @transform_6(%arg0: i32) -> (i32, i32) {
    %c0_i32 = arith.constant 0 : i32
    %c0_i32_0 = arith.constant 0 : i32
    %c0_i32_1 = arith.constant 0 : i32
    return %c0_i32, %c0_i32_0 : i32, i32
  }
  func.func @transform_7(%arg0: i32) -> (i32, i32) {
    %c0_i32 = arith.constant 0 : i32
    %c0_i32_0 = arith.constant 0 : i32
    %c0_i32_1 = arith.constant 0 : i32
    return %c0_i32, %c0_i32_0 : i32, i32
  }
  func.func @transform_8(%arg0: i32) -> (i32, i32) {
    %c0_i32 = arith.constant 0 : i32
    %c0_i32_0 = arith.constant 0 : i32
    %c0_i32_1 = arith.constant 0 : i32
    return %c0_i32, %c0_i32_0 : i32, i32
  }
  func.func @transform_9(%arg0: i32) -> (i32, i32) {
    %c0_i32 = arith.constant 0 : i32
    %c0_i32_0 = arith.constant 0 : i32
    %c0_i32_1 = arith.constant 0 : i32
    return %c0_i32, %c0_i32_0 : i32, i32
  }
  func.func @transform_10(%arg0: i32) -> (i32, i32) {
    %c0_i32 = arith.constant 0 : i32
    %c0_i32_0 = arith.constant 0 : i32
    %c0_i32_1 = arith.constant 0 : i32
    return %c0_i32, %c0_i32_0 : i32, i32
  }
  func.func @transform_11(%arg0: i32) -> (i32, i32) {
    %c0_i32 = arith.constant 0 : i32
    %c0_i32_0 = arith.constant 0 : i32
    return %arg0, %c0_i32 : i32, i32
  }
}

</mosaic_0001>

<llo_original>
// kernel: tpu_custom_call.1
$region0: #{tpu_custom_call.1}
  #allocation0 [shape = 'u32[]', space=smem, size = 0x4, offset = 0x4, fixed_abs, tag = 'smem constant byte address 0x4 - core index']
  #allocation1 [shape = 'u32[144,128]{1,0:T(1,128)}', space=vmem, size = 0x12000, scoped, tag = 'internal scratch']
  %s0 = inlined_call_operand.vmem [shape: f32[8,8], index: 0, kind: input, shape index: {}]
  %s1 = inlined_call_operand.vmem [shape: bf16[8,32], index: 1, kind: input, shape index: {}]
  %s2 = inlined_call_operand.vmem [shape: f32[1,32], index: 2, kind: input, shape index: {}]
  %s3 = inlined_call_operand.vmem [shape: f32[1,32], index: 3, kind: input, shape index: {}]
  %s4 = inlined_call_operand.vmem [shape: f32[1,32], index: 4, kind: input, shape index: {}]
  %s5 = inlined_call_operand.vmem [shape: bf16[32,32], index: 5, kind: input, shape index: {}]
  %s6 = inlined_call_operand.vmem [shape: f32[1,32], index: 6, kind: input, shape index: {}]
  %s7 = inlined_call_operand.vmem [shape: f32[1,32], index: 7, kind: input, shape index: {}]
  %s8 = inlined_call_operand.vmem [shape: f32[1,32], index: 8, kind: input, shape index: {}]
  %s9 = inlined_call_operand.vmem [shape: bf16[32,10], index: 9, kind: input, shape index: {}]
  %s10 = inlined_call_operand.vmem [shape: f32[1,10], index: 10, kind: input, shape index: {}]
  %s11 = inlined_call_operand.hbm [shape: f32[8,10], index: 11, kind: output, shape index: {}]
  %s12 = sld [smem:[#allocation0]]
  $region54: #{tpu_custom_call.1} parent=0
    _
  %s14 = ssub.s32 1, %s12
  %s15 = scalar_select 0, %s14, %s12
  $region1: #{tpu_custom_call.1} parent=0
    #allocation2 [shape = 'u8[4096]{0}', space=vmem, size = 0x1000, scoped, tag = 'output window, operand 0, single buffered']
    #allocation3 [shape = 's32[1]{0}', space=sflag, size = 0x4, scoped, tag = 'scoped memory for tpu_custom_call.1']
    %16 = vsyncpa [#allocation3], 0
    // Predicated region
    $region2: #{tpu_custom_call.1} parent=1 // pred_check
      _
    $region3: #{tpu_custom_call.1} parent=1 // pred_check_branch
      %18 = sbr.rel (0) target = $region5
    $region4: #{tpu_custom_call.1} parent=1 // pred_region
      _
    $region5: #{tpu_custom_call.1} parent=1 // pred_fallthru
      _
    // Predicated region
    $region6: #{tpu_custom_call.1} parent=1 // pred_check
      _
    $region7: #{tpu_custom_call.1} parent=1 // pred_check_branch
      %20 = sbr.rel (0) target = $region9
    $region8: #{tpu_custom_call.1} parent=1 // pred_region
      _
    $region9: #{tpu_custom_call.1} parent=1 // pred_fallthru
      _
    // Predicated region
    $region10: #{tpu_custom_call.1} parent=1 // pred_check
      _
    $region11: #{tpu_custom_call.1} parent=1 // pred_check_branch
      %22 = sbr.rel (0) target = $region13
    $region12: #{tpu_custom_call.1} parent=1 // pred_region
      _
    $region13: #{tpu_custom_call.1} parent=1 // pred_fallthru
      _
    // Predicated region
    $region14: #{tpu_custom_call.1} parent=1 // pred_check
      _
    $region15: #{tpu_custom_call.1} parent=1 // pred_check_branch
      %24 = sbr.rel (0) target = $region17
    $region16: #{tpu_custom_call.1} parent=1 // pred_region
      _
    $region17: #{tpu_custom_call.1} parent=1 // pred_fallthru
      _
    // Predicated region
    $region18: #{tpu_custom_call.1} parent=1 // pred_check
      _
    $region19: #{tpu_custom_call.1} parent=1 // pred_check_branch
      %26 = sbr.rel (0) target = $region21
    $region20: #{tpu_custom_call.1} parent=1 // pred_region
      _
    $region21: #{tpu_custom_call.1} parent=1 // pred_fallthru
      _
    // Predicated region
    $region22: #{tpu_custom_call.1} parent=1 // pred_check
      _
    $region23: #{tpu_custom_call.1} parent=1 // pred_check_branch
      %28 = sbr.rel (0) target = $region25
    $region24: #{tpu_custom_call.1} parent=1 // pred_region
      _
    $region25: #{tpu_custom_call.1} parent=1 // pred_fallthru
      _
    // Predicated region
    $region26: #{tpu_custom_call.1} parent=1 // pred_check
      _
    $region27: #{tpu_custom_call.1} parent=1 // pred_check_branch
      %30 = sbr.rel (0) target = $region29
    $region28: #{tpu_custom_call.1} parent=1 // pred_region
      _
    $region29: #{tpu_custom_call.1} parent=1 // pred_fallthru
      _
    // Predicated region
    $region30: #{tpu_custom_call.1} parent=1 // pred_check
      _
    $region31: #{tpu_custom_call.1} parent=1 // pred_check_branch
      %32 = sbr.rel (0) target = $region33
    $region32: #{tpu_custom_call.1} parent=1 // pred_region
      _
    $region33: #{tpu_custom_call.1} parent=1 // pred_fallthru
      _
    // Predicated region
    $region34: #{tpu_custom_call.1} parent=1 // pred_check
      _
    $region35: #{tpu_custom_call.1} parent=1 // pred_check_branch
      %34 = sbr.rel (0) target = $region37
    $region36: #{tpu_custom_call.1} parent=1 // pred_region
      _
    $region37: #{tpu_custom_call.1} parent=1 // pred_fallthru
      _
    // Predicated region
    $region38: #{tpu_custom_call.1} parent=1 // pred_check
      _
    $region39: #{tpu_custom_call.1} parent=1 // pred_check_branch
      %36 = sbr.rel (0) target = $region41
    $region40: #{tpu_custom_call.1} parent=1 // pred_region
      _
    $region41: #{tpu_custom_call.1} parent=1 // pred_fallthru
      _
    // Predicated region
    $region42: #{tpu_custom_call.1} parent=1 // pred_check
      _
    $region43: #{tpu_custom_call.1} parent=1 // pred_check_branch
      %38 = sbr.rel (0) target = $region45
    $region44: #{tpu_custom_call.1} parent=1 // pred_region
      _
    $region45: #{tpu_custom_call.1} parent=1 // pred_fallthru
      _
    %v40 = vld [vmem:[%s0] sm:$0xff]
    %v41 = vpack.c.bf16 %v40, %v40
    %v42 = vld [vmem:[%s1] sm:$0xf]
    %v43 = vld [vmem:[%s2] sm:$0x1]
    %v45 = vlaneseq
    %v46 = vshrl.u32 %v45, 7
    %v47 = vsub.s32 0, %v46
    %v48 = vrot.slane %v43, %v47
    %vm50 = vcmask 64512
    %v52 = vsel %vm50, %v41, 0
    %vm54 = vcmask 1043456
    %v56 = vsel %vm54, %v42, 0
    %58 = vmatprep.subr.bf16.mxu0 0
    %59 = vmatpush1.bf16.msra.mxu0 %v56
    %60 = vmatprep.subr.bf16.mxu0 0
    %61 = vmatpush1.bf16.msra.mxu0 0
    %62 = vmatprep.subr.bf16.mxu0 0
    %63 = vmatpush1.bf16.msra.mxu0 0
    %64 = vmatprep.subr.bf16.mxu0 0
    %65 = vmatpush1.bf16.msra.mxu0 0
    %66 = vmatprep.subr.bf16.mxu0 0
    %67 = vmatpush1.bf16.msra.mxu0 0
    %68 = vmatprep.subr.bf16.mxu0 0
    %69 = vmatpush1.bf16.msra.mxu0 0
    %70 = vmatprep.subr.bf16.mxu0 0
    %71 = vmatpush1.bf16.msra.mxu0 0
    %72 = vmatprep.subr.bf16.mxu0 0
    %73 = vmatpush1.bf16.msra.mxu0 0
    %74 = vmatprep.subr.bf16.mxu0 0
    %75 = vmatpush1.bf16.msra.mxu0 0
    %76 = vmatprep.subr.bf16.mxu0 0
    %77 = vmatpush1.bf16.msra.mxu0 0
    %78 = vmatprep.subr.bf16.mxu0 0
    %79 = vmatpush1.bf16.msra.mxu0 0
    %80 = vmatprep.subr.bf16.mxu0 0
    %81 = vmatpush1.bf16.msra.mxu0 0
    %82 = vmatprep.subr.bf16.mxu0 0
    %83 = vmatpush1.bf16.msra.mxu0 0
    %84 = vmatprep.subr.bf16.mxu0 0
    %85 = vmatpush1.bf16.msra.mxu0 0
    %86 = vmatprep.subr.bf16.mxu0 0
    %87 = vmatpush1.bf16.msra.mxu0 0
    %88 = vmatprep.subr.bf16.mxu0 0
    %89 = vmatpush1.bf16.msra.mxu0 0
    %90 = vmatprep.mubr.bf16.mxu0 0
    %91 = vmatmul.mubr.bf16.gmra.mrb[0].mxu0 %v52
    %v92 = vpop.f32.mrb[0].mxu0
    %v93 = vadd.f32 %v48, %v92
    %v94 = vpop.f32.mrb[0].mxu0
    %v95 = vpop.f32.mrb[0].mxu0
    %v96 = vpop.f32.mrb[0].mxu0
    %97 = vdwg.mxu0
    %v98 = vmax.f32 %v93, 0.0
    %v99 = vld [vmem:[%s3] sm:$0x1]
    %v100 = vld [vmem:[%s4] sm:$0x1]
    %vm101 = vcmask 261120
    %v102 = vsel %vm101, %v98, 0.0
    %103 = vadd.xlane.f32.xlu0 %v102
    %v104 = vpop.xlane.xlu0 %103
    %v105 = vrcp.pop 32.0
    %v106 = vmul.f32 %v104, %v105
    %v107 = vsub.f32 %v98, %v106
    %v108 = vmul.f32 %v107, %v107
    %v109 = vsel %vm101, %v108, 0.0
    %110 = vadd.xlane.f32.xlu0 %v109
    %v111 = vpop.xlane.xlu0 %110
    %v112 = vmul.f32 %v111, %v105
    %v113 = vadd.f32 %v112, 1e-05
    %v114 = vrsqrt.pop %v113
    %v115 = vmul.f32 %v107, %v114
    %v117 = vlaneseq
    %v118 = vshrl.u32 %v117, 7
    %v119 = vsub.s32 0, %v118
    %v120 = vrot.slane %v99, %v119
    %v122 = vmul.f32 %v115, %v120
    %v124 = vlaneseq
    %v125 = vshrl.u32 %v124, 7
    %v126 = vsub.s32 0, %v125
    %v127 = vrot.slane %v100, %v126
    %v129 = vadd.f32 %v122, %v127
    %v130 = vpack.c.bf16 %v129, %v129
    %v131 = vld [vmem:[%s5] sm:$0xf]
    %v132 = vld [vmem:[%s5 + $0x4] sm:$0xf]
    %v133 = vld [vmem:[%s5 + $0x8] sm:$0xf]
    %v134 = vld [vmem:[%s5 + $0xc] sm:$0xf]
    %v135 = vld [vmem:[%s6] sm:$0x1]
    %v137 = vlaneseq
    %v138 = vshrl.u32 %v137, 7
    %v139 = vsub.s32 0, %v138
    %v140 = vrot.slane %v135, %v139
    %v146 = vunpack.c.l.b16 %v131
    %v147 = vunpack.c.l.b16 %v132
    %v148 = vunpack.c.l.b16 %v133
    %v149 = vunpack.c.l.b16 %v134
    %v150 = vpack.c.b16 %v147, %v146
    %v151 = vpack.c.b16 %v149, %v148
    %v155 = vsel %vm101, %v130, 0
    %157 = vmatprep.subr.bf16.mxu0 0
    %158 = vmatpush1.bf16.msra.mxu0 %v150
    %159 = vmatprep.subr.bf16.mxu0 0
    %160 = vmatpush1.bf16.msra.mxu0 %v151
    %161 = vmatprep.subr.bf16.mxu0 0
    %162 = vmatpush1.bf16.msra.mxu0 0
    %163 = vmatprep.subr.bf16.mxu0 0
    %164 = vmatpush1.bf16.msra.mxu0 0
    %165 = vmatprep.subr.bf16.mxu0 0
    %166 = vmatpush1.bf16.msra.mxu0 0
    %167 = vmatprep.subr.bf16.mxu0 0
    %168 = vmatpush1.bf16.msra.mxu0 0
    %169 = vmatprep.subr.bf16.mxu0 0
    %170 = vmatpush1.bf16.msra.mxu0 0
    %171 = vmatprep.subr.bf16.mxu0 0
    %172 = vmatpush1.bf16.msra.mxu0 0
    %173 = vmatprep.subr.bf16.mxu0 0
    %174 = vmatpush1.bf16.msra.mxu0 0
    %175 = vmatprep.subr.bf16.mxu0 0
    %176 = vmatpush1.bf16.msra.mxu0 0
    %177 = vmatprep.subr.bf16.mxu0 0
    %178 = vmatpush1.bf16.msra.mxu0 0
    %179 = vmatprep.subr.bf16.mxu0 0
    %180 = vmatpush1.bf16.msra.mxu0 0
    %181 = vmatprep.subr.bf16.mxu0 0
    %182 = vmatpush1.bf16.msra.mxu0 0
    %183 = vmatprep.subr.bf16.mxu0 0
    %184 = vmatpush1.bf16.msra.mxu0 0
    %185 = vmatprep.subr.bf16.mxu0 0
    %186 = vmatpush1.bf16.msra.mxu0 0
    %187 = vmatprep.subr.bf16.mxu0 0
    %188 = vmatpush1.bf16.msra.mxu0 0
    %189 = vmatprep.mubr.bf16.mxu0 0
    %190 = vmatmul.mubr.bf16.gmra.mrb[0].mxu0 %v155
    %v191 = vpop.f32.mrb[0].mxu0
    %v192 = vadd.f32 %v140, %v191
    %v193 = vpop.f32.mrb[0].mxu0
    %v194 = vpop.f32.mrb[0].mxu0
    %v195 = vpop.f32.mrb[0].mxu0
    %196 = vdwg.mxu0
    %v197 = vadd.f32 %v192, %v129
    %v198 = vmax.f32 %v197, 0.0
    %v199 = vld [vmem:[%s7] sm:$0x1]
    %v200 = vld [vmem:[%s8] sm:$0x1]
    %v201 = vsel %vm101, %v198, 0.0
    %202 = vadd.xlane.f32.xlu0 %v201
    %v203 = vpop.xlane.xlu0 %202
    %v204 = vmul.f32 %v203, %v105
    %v205 = vsub.f32 %v198, %v204
    %v206 = vmul.f32 %v205, %v205
    %v207 = vsel %vm101, %v206, 0.0
    %208 = vadd.xlane.f32.xlu0 %v207
    %v209 = vpop.xlane.xlu0 %208
    %v210 = vmul.f32 %v209, %v105
    %v211 = vadd.f32 %v210, 1e-05
    %v212 = vrsqrt.pop %v211
    %v213 = vmul.f32 %v205, %v212
    %v215 = vlaneseq
    %v216 = vshrl.u32 %v215, 7
    %v217 = vsub.s32 0, %v216
    %v218 = vrot.slane %v199, %v217
    %v220 = vmul.f32 %v213, %v218
    %v222 = vlaneseq
    %v223 = vshrl.u32 %v222, 7
    %v224 = vsub.s32 0, %v223
    %v225 = vrot.slane %v200, %v224
    %v227 = vadd.f32 %v220, %v225
    %v228 = vpack.c.bf16 %v227, %v227
    %v229 = vld [vmem:[%s9] sm:$0xf]
    %v230 = vld [vmem:[%s9 + $0x4] sm:$0xf]
    %v231 = vld [vmem:[%s9 + $0x8] sm:$0xf]
    %v232 = vld [vmem:[%s9 + $0xc] sm:$0xf]
    %v233 = vld [vmem:[%s10] sm:$0x1]
    %v235 = vlaneseq
    %v236 = vshrl.u32 %v235, 7
    %v237 = vsub.s32 0, %v236
    %v238 = vrot.slane %v233, %v237
    %v244 = vunpack.c.l.b16 %v229
    %v245 = vunpack.c.l.b16 %v230
    %v246 = vunpack.c.l.b16 %v231
    %v247 = vunpack.c.l.b16 %v232
    %v248 = vpack.c.b16 %v245, %v244
    %v249 = vpack.c.b16 %v247, %v246
    %v253 = vsel %vm101, %v228, 0
    %255 = vmatprep.subr.bf16.mxu0 0
    %256 = vmatpush1.bf16.msra.mxu0 %v248
    %257 = vmatprep.subr.bf16.mxu0 0
    %258 = vmatpush1.bf16.msra.mxu0 %v249
    %259 = vmatprep.subr.bf16.mxu0 0
    %260 = vmatpush1.bf16.msra.mxu0 0
    %261 = vmatprep.subr.bf16.mxu0 0
    %262 = vmatpush1.bf16.msra.mxu0 0
    %263 = vmatprep.subr.bf16.mxu0 0
    %264 = vmatpush1.bf16.msra.mxu0 0
    %265 = vmatprep.subr.bf16.mxu0 0
    %266 = vmatpush1.bf16.msra.mxu0 0
    %267 = vmatprep.subr.bf16.mxu0 0
    %268 = vmatpush1.bf16.msra.mxu0 0
    %269 = vmatprep.subr.bf16.mxu0 0
    %270 = vmatpush1.bf16.msra.mxu0 0
    %271 = vmatprep.subr.bf16.mxu0 0
    %272 = vmatpush1.bf16.msra.mxu0 0
    %273 = vmatprep.subr.bf16.mxu0 0
    %274 = vmatpush1.bf16.msra.mxu0 0
    %275 = vmatprep.subr.bf16.mxu0 0
    %276 = vmatpush1.bf16.msra.mxu0 0
    %277 = vmatprep.subr.bf16.mxu0 0
    %278 = vmatpush1.bf16.msra.mxu0 0
    %279 = vmatprep.subr.bf16.mxu0 0
    %280 = vmatpush1.bf16.msra.mxu0 0
    %281 = vmatprep.subr.bf16.mxu0 0
    %282 = vmatpush1.bf16.msra.mxu0 0
    %283 = vmatprep.subr.bf16.mxu0 0
    %284 = vmatpush1.bf16.msra.mxu0 0
    %285 = vmatprep.subr.bf16.mxu0 0
    %286 = vmatpush1.bf16.msra.mxu0 0
    %287 = vmatprep.mubr.bf16.mxu0 0
    %288 = vmatmul.mubr.bf16.gmra.mrb[0].mxu0 %v253
    %v289 = vpop.f32.mrb[0].mxu0
    %v290 = vadd.f32 %v238, %v289
    %v291 = vpop.f32.mrb[0].mxu0
    %v292 = vpop.f32.mrb[0].mxu0
    %v293 = vpop.f32.mrb[0].mxu0
    %294 = vdwg.mxu0
    %vm295 = vcmask 80896
    %v296 = vsel %vm295, %v290, -inf
    %297 = vmax.xlane.f32.xlu0 %v296
    %v298 = vpop.xlane.xlu0 %297
    %v299 = vsub.f32 %v290, %v298
    %v300 = vmul.f32 %v299, 1.442695
    %v301 = vpow.pop %v300
    %v302 = vsel %vm295, %v301, 0.0
    %303 = vadd.xlane.f32.xlu0 %v302
    %v304 = vpop.xlane.xlu0 %303
    %v305 = vrcp.pop %v304
    %v306 = vmul.f32 %v301, %v305
    %307 = vst.msk [vmem:[#allocation2] sm:$0xff] %vm295, %v306
    // Predicated region
    $region46: #{tpu_custom_call.1} parent=1 // pred_check
      _
    $region47: #{tpu_custom_call.1} parent=1 // pred_check_branch
      %309 = sbr.rel (0) target = $region49
    $region48: #{tpu_custom_call.1} parent=1 // pred_region
      %s311 = ssub.s32 128, 128
      %312 = vsyncadd [#allocation3], %s311
      %s314 = sshll.u32 [#allocation2], 4
      %s315 = int_to_ptr.vmem [resolvable:$true] %s314
      %317 = dma.vmem_to_hbm [thread:$0]  %s315, 128, %s11, [#allocation3]
    $region49: #{tpu_custom_call.1} parent=1 // pred_fallthru
      _
    // Predicated region
    $region50: #{tpu_custom_call.1} parent=1 // pred_check
      _
    $region51: #{tpu_custom_call.1} parent=1 // pred_check_branch
      %319 = sbr.rel (0) target = $region53
    $region52: #{tpu_custom_call.1} parent=1 // pred_region
      %320 = dma.done [#allocation3], 128
    $region53: #{tpu_custom_call.1} parent=1 // pred_fallthru
      _
    %321 = vsyncpa [#allocation3], 1

</llo_original>
